<compile_context>
chip_gen: v6e
topology: v6e:2x2x1
jax: 0.10.0
libtpu: 0.0.40
codegen_flags: <defaults>
</compile_context>

<pallas_src>
import jax
import jax.numpy as jnp
import numpy as np
from jax.experimental import pallas as pl
from jax.experimental.pallas import tpu as pltpu


def _attn_predictor_kernel(x_ref, c_ref, o_ref):
    """Per grid step: one batch tile.

    x_ref : (S, TB) f32 in VMEM  — sequence on sublanes, batch on lanes.
    c_ref : (4,)    f32 in SMEM  — folded params [a0, a1, c_v, c_o].
    o_ref : (1, TB) f32 in VMEM  — lane-dense output row.
    """
    x = x_ref[...]                                   # (S, TB)
    a0 = c_ref[0]
    a1 = c_ref[1]
    c_v = c_ref[2]
    c_o = c_ref[3]

    x_last = x[-1:, :]                               # (1, TB) last token of each sequence
    alpha = x_last * a0 + a1                         # per-sequence logit slope (folded Q.K / sqrt(D))

    s = alpha * x                                    # (S, TB) attention logits (shift-invariant form)
    m = jnp.max(s, axis=0, keepdims=True)            # (1, TB) stable-softmax max over the sequence
    e = jnp.exp(s - m)                               # (S, TB)
    denom = jnp.sum(e, axis=0, keepdims=True)        # (1, TB)
    xv = jnp.sum(e * x, axis=0, keepdims=True) / denom   # (1, TB) softmax-weighted mean of x

    o_ref[...] = xv * c_v + c_o                      # folded V / proj — dense (1, TB) store


def _pick_batch_tile(B: int, S: int) -> int:
    """Batch lives on the lane axis: the tile is either the whole (small) batch, which is
    always BlockSpec-legal (block == full dim), or a multiple of 128 lanes.  For large B we
    target >= 2 grid steps (v7x megacore) and cap the per-step x block around ~2 MiB."""
    if B < 256:
        return B
    max_lanes_by_vmem = max(128, (((1 << 19) // max(S, 1)) // 128) * 128)   # ~2 MiB f32 block
    tb = min(2048, max_lanes_by_vmem, ((B // 2) // 128) * 128)
    return max(tb, 128)


def _fold_params(params):
    """Fold lift/Q/K/V/proj into 4 scalars (exact, parameter-only; done once in the wrapper)."""
    D = params["lift_w"].shape[0]
    hp = jax.lax.Precision.HIGHEST
    wl = params["lift_w"][:, 0].astype(jnp.float32)          # (D,)
    bl = params["lift_b"].astype(jnp.float32)                # (D,)

    wq_eff = jnp.dot(params["q_w"], wl, precision=hp)
    bq_eff = jnp.dot(params["q_w"], bl, precision=hp) + params["q_b"]
    wk_eff = jnp.dot(params["k_w"], wl, precision=hp)
    bk_eff = jnp.dot(params["k_w"], bl, precision=hp) + params["k_b"]
    wv_eff = jnp.dot(params["v_w"], wl, precision=hp)
    bv_eff = jnp.dot(params["v_w"], bl, precision=hp) + params["v_b"]
    pw = params["proj_w"][0, :]
    pb = params["proj_b"][0]

    inv_scale = 1.0 / (float(D) ** 0.5)
    a0 = jnp.dot(wq_eff, wk_eff, precision=hp) * inv_scale   # slope of logits in x[b,s]
    a1 = jnp.dot(bq_eff, wk_eff, precision=hp) * inv_scale
    c_v = jnp.dot(wv_eff, pw, precision=hp)                  # proj of the x-dependent V part
    c_o = jnp.dot(bv_eff, pw, precision=hp) + pb             # proj of the constant V part + bias
    return jnp.stack([a0, a1, c_v, c_o]).astype(jnp.float32)


def attention_predictor_forward(x, params, *, batch_tile=None):
    """x: (B, 1, S) float32 (PyTorch NCW input). Returns (B, 1)."""
    B, C, S = x.shape
    assert C == 1, "AttentionPredictor expects a single input channel"

    consts = _fold_params(params)                             # (4,) f32 -> SMEM
    x_cols = jnp.transpose(x[:, 0, :]).astype(jnp.float32)    # (S, B): batch on lanes

    if batch_tile is None:
        batch_tile = _pick_batch_tile(B, S)
    b_pad = -(-B // batch_tile) * batch_tile
    if b_pad != B:
        x_cols = jnp.pad(x_cols, ((0, 0), (0, b_pad - B)))    # padded columns are independent
    num_tiles = b_pad // batch_tile

    out_row = pl.pallas_call(
        _attn_predictor_kernel,
        out_shape=jax.ShapeDtypeStruct((1, b_pad), jnp.float32),
        grid=(num_tiles,),
        in_specs=[
            pl.BlockSpec((S, batch_tile), lambda i: (0, i)),               # x tile (VMEM)
            pl.BlockSpec(memory_space=pltpu.MemorySpace.SMEM),             # folded scalars (SMEM)
        ],
        out_specs=pl.BlockSpec((1, batch_tile), lambda i: (0, i)),         # lane-dense output row
        compiler_params=pltpu.CompilerParams(
            dimension_semantics=("parallel",),
        ),
    )(x_cols, consts)

    return out_row[0, :B].reshape(B, 1)


def _reference_forward(x, params):
    """Pure-JAX reference mirroring the PyTorch forward exactly (full attention)."""
    D = params["lift_w"].shape[0]
    hp = jax.lax.Precision.HIGHEST
    xt = jnp.transpose(x, (0, 2, 1))                                        # (B, S, 1)
    lifted = xt @ params["lift_w"].T + params["lift_b"]                     # (B, S, D)
    q = jnp.einsum("bsd,ed->bse", lifted, params["q_w"], precision=hp) + params["q_b"]
    k = jnp.einsum("bsd,ed->bse", lifted, params["k_w"], precision=hp) + params["k_b"]
    v = jnp.einsum("bsd,ed->bse", lifted, params["v_w"], precision=hp) + params["v_b"]
    scores = jnp.einsum("bqd,bkd->bqk", q, k, precision=hp) / (float(D) ** 0.5)
    w = jax.nn.softmax(scores, axis=-1)
    attn = jnp.einsum("bqk,bkd->bqd", w, v, precision=hp)
    last = attn[:, -1, :]
    return jnp.einsum("bd,ed->be", last, params["proj_w"], precision=hp) + params["proj_b"]


def _init_params(key, d_model):
    """Deterministic synthetic parameters with PyTorch Linear weight shapes (out, in)."""
    keys = jax.random.split(key, 10)
    s = 0.1
    return {
        "lift_w": s * jax.random.normal(keys[0], (d_model, 1), jnp.float32),
        "lift_b": s * jax.random.normal(keys[1], (d_model,), jnp.float32),
        "q_w": s * jax.random.normal(keys[2], (d_model, d_model), jnp.float32),
        "q_b": s * jax.random.normal(keys[3], (d_model,), jnp.float32),
        "k_w": s * jax.random.normal(keys[4], (d_model, d_model), jnp.float32),
        "k_b": s * jax.random.normal(keys[5], (d_model,), jnp.float32),
        "v_w": s * jax.random.normal(keys[6], (d_model, d_model), jnp.float32),
        "v_b": s * jax.random.normal(keys[7], (d_model,), jnp.float32),
        "proj_w": s * jax.random.normal(keys[8], (1, d_model), jnp.float32),
        "proj_b": s * jax.random.normal(keys[9], (1,), jnp.float32),
    }


if __name__ == "__main__":
    B, S, D = 2, 8, 32   # batch, window (seq), d_model

    key = jax.random.PRNGKey(0)
    kx, kp = jax.random.split(key)
    x = jax.random.normal(kx, (B, 1, S), jnp.float32)   # NCW, like the PyTorch module input
    params = _init_params(kp, D)

    out = attention_predictor_forward(x, params)
    out = jax.block_until_ready(out)

    ref = _reference_forward(x, params)
    # Kernel math is an exact algebraic rewrite; tolerance only covers f32 re-association.
    np.testing.assert_allclose(np.asarray(out), np.asarray(ref), rtol=2e-3, atol=1e-3)

    print("KERNEL_OK")
</pallas_src>

<mosaic_0001>
module attributes {stable_mosaic.version = 11 : i64} {
  func.func @_attn_predictor_kernel(%arg0: i32, %arg1: memref<8x2xf32, #tpu.memory_space<vmem>>, %arg2: memref<4xf32, #tpu.memory_space<smem>>, %arg3: memref<1x2xf32, #tpu.memory_space<vmem>>) attributes {dimension_semantics = [#tpu.dimension_semantics<parallel>], iteration_bounds = array<i64: 1>, scalar_prefetch = 0 : i64, scratch_operands = 0 : i64, tpu.core_type = #tpu.core_type<tc>, window_params = [{transform_indices = @transform_0, window_bounds = array<i64: 8, 2>}, {transform_indices = @transform_1, window_bounds = array<i64: 4>}, {transform_indices = @transform_2, window_bounds = array<i64: 1, 2>}]} {
    %c0 = arith.constant 0 : index
    %c0_0 = arith.constant 0 : index
    %0 = vector.load %arg1[%c0, %c0_0] : memref<8x2xf32, #tpu.memory_space<vmem>>, vector<8x2xf32>
    %c0_1 = arith.constant 0 : index
    %1 = memref.load %arg2[%c0_1] : memref<4xf32, #tpu.memory_space<smem>>
    %c1 = arith.constant 1 : index
    %2 = memref.load %arg2[%c1] : memref<4xf32, #tpu.memory_space<smem>>
    %c2 = arith.constant 2 : index
    %3 = memref.load %arg2[%c2] : memref<4xf32, #tpu.memory_space<smem>>
    %c3 = arith.constant 3 : index
    %4 = memref.load %arg2[%c3] : memref<4xf32, #tpu.memory_space<smem>>
    %5 = vector.extract_strided_slice %0 {offsets = [7, 0], sizes = [1, 2], strides = [1, 1]} : vector<8x2xf32> to vector<1x2xf32>
    %6 = vector.broadcast %1 : f32 to vector<1x2xf32>
    %7 = arith.mulf %5, %6 : vector<1x2xf32>
    %8 = vector.broadcast %2 : f32 to vector<1x2xf32>
    %9 = arith.addf %7, %8 : vector<1x2xf32>
    %10 = vector.broadcast %9 : vector<1x2xf32> to vector<8x2xf32>
    %11 = arith.mulf %10, %0 : vector<8x2xf32>
    %cst = arith.constant dense<0xFF800000> : vector<2xf32>
    %12 = vector.multi_reduction <maximumf>, %11, %cst [0] : vector<8x2xf32> to vector<2xf32>
    %13 = vector.shape_cast %12 : vector<2xf32> to vector<1x2xf32>
    %14 = vector.broadcast %13 : vector<1x2xf32> to vector<8x2xf32>
    %15 = arith.subf %11, %14 : vector<8x2xf32>
    %16 = math.exp %15 : vector<8x2xf32>
    %cst_2 = arith.constant dense<0.000000e+00> : vector<2xf32>
    %17 = vector.multi_reduction <add>, %16, %cst_2 [0] : vector<8x2xf32> to vector<2xf32>
    %18 = vector.shape_cast %17 : vector<2xf32> to vector<1x2xf32>
    %19 = arith.mulf %16, %0 : vector<8x2xf32>
    %cst_3 = arith.constant dense<0.000000e+00> : vector<2xf32>
    %20 = vector.multi_reduction <add>, %19, %cst_3 [0] : vector<8x2xf32> to vector<2xf32>
    %21 = vector.shape_cast %20 : vector<2xf32> to vector<1x2xf32>
    %22 = arith.divf %21, %18 : vector<1x2xf32>
    %23 = vector.broadcast %3 : f32 to vector<1x2xf32>
    %24 = arith.mulf %22, %23 : vector<1x2xf32>
    %25 = vector.broadcast %4 : f32 to vector<1x2xf32>
    %26 = arith.addf %24, %25 : vector<1x2xf32>
    %c0_4 = arith.constant 0 : index
    %c0_5 = arith.constant 0 : index
    %27 = vector.load %arg3[%c0_4, %c0_5] : memref<1x2xf32, #tpu.memory_space<vmem>>, vector<1x2xf32>
    tpu.vector_store %arg3[%c0_4, %c0_5], %26 {strides = array<i32>} : memref<1x2xf32, #tpu.memory_space<vmem>>, vector<1x2xf32>,
    return
  }
  func.func @transform_0(%arg0: i32) -> (i32, i32) {
    %c0_i32 = arith.constant 0 : i32
    %c0_i32_0 = arith.constant 0 : i32
    return %c0_i32, %arg0 : i32, i32
  }
  func.func @transform_1(%arg0: i32) -> i32 {
    %c0_i32 = arith.constant 0 : i32
    %c0_i32_0 = arith.constant 0 : i32
    return %c0_i32 : i32
  }
  func.func @transform_2(%arg0: i32) -> (i32, i32) {
    %c0_i32 = arith.constant 0 : i32
    %c0_i32_0 = arith.constant 0 : i32
    return %c0_i32, %arg0 : i32, i32
  }
}

</mosaic_0001>

<llo_original>
// kernel: tpu_custom_call.1
$region0: #{tpu_custom_call.1}
  #allocation0 [shape = 'u32[]', space=smem, size = 0x4, offset = 0x4, fixed_abs, tag = 'smem constant byte address 0x4 - core index']
  #allocation1 [shape = 'u32[144,128]{1,0:T(1,128)}', space=vmem, size = 0x12000, scoped, tag = 'internal scratch']
  %s0 = inlined_call_operand.vmem [shape: f32[8,2], index: 0, kind: input, shape index: {}]
  %s1 = inlined_call_operand.vmem [shape: f32[4], index: 1, kind: input, shape index: {}]
  %s2 = inlined_call_operand.hbm [shape: f32[1,2], index: 2, kind: output, shape index: {}]
  %s3 = sld [smem:[#allocation0]]
  $region22: #{tpu_custom_call.1} parent=0
    _
  %s5 = ssub.s32 1, %s3
  %s6 = scalar_select 0, %s5, %s3
  $region1: #{tpu_custom_call.1} parent=0
    #allocation2 [shape = 'u8[512]{0}', space=smem, size = 0x200, scoped, tag = 'input window, operand 1, single buffered']
    #allocation3 [shape = 's32[1]{0}', space=sflag, size = 0x4, scoped, tag = 'scoped memory for tpu_custom_call.1']
    #allocation4 [shape = 's32[1]{0}', space=sflag, size = 0x4, scoped, tag = 'scoped memory for tpu_custom_call.1']
    #allocation5 [shape = 'u8[512]{0}', space=vmem, size = 0x400, scoped, tag = 'output window, operand 0, single buffered']
    %7 = vsyncpa [#allocation4], 0
    %8 = vsyncpa [#allocation3], 0
    // Predicated region
    $region2: #{tpu_custom_call.1} parent=1 // pred_check
      _
    $region3: #{tpu_custom_call.1} parent=1 // pred_check_branch
      %10 = sbr.rel (0) target = $region5
    $region4: #{tpu_custom_call.1} parent=1 // pred_region
      _
    $region5: #{tpu_custom_call.1} parent=1 // pred_fallthru
      _
    // Predicated region
    $region6: #{tpu_custom_call.1} parent=1 // pred_check
      _
    $region7: #{tpu_custom_call.1} parent=1 // pred_check_branch
      %12 = sbr.rel (0) target = $region9
    $region8: #{tpu_custom_call.1} parent=1 // pred_region
      %s14 = ssub.s32 16, 16
      %15 = vsyncadd [#allocation4], %s14
      %s17 = sshll.u32 %s1, 4
      %s18 = int_to_ptr.vmem [resolvable:$true] %s17
      %20 = dma.vmem_to_smem %s18, 16, [#allocation2], [#allocation4]
    $region9: #{tpu_custom_call.1} parent=1 // pred_fallthru
      _
    // Predicated region
    $region10: #{tpu_custom_call.1} parent=1 // pred_check
      _
    $region11: #{tpu_custom_call.1} parent=1 // pred_check_branch
      %22 = sbr.rel (0) target = $region13
    $region12: #{tpu_custom_call.1} parent=1 // pred_region
      %23 = dma.done [#allocation4], 16
    $region13: #{tpu_custom_call.1} parent=1 // pred_fallthru
      _
    %24 = sfence
    %v25 = vld [vmem:[%s0] sm:$0xff]
    %s26 = sld [smem:[#allocation2]]
    %s27 = sld [smem:[#allocation2 + $0x1]]
    %s28 = sld [smem:[#allocation2 + $0x2]]
    %s29 = sld [smem:[#allocation2 + $0x3]]
    %v30 = vstv %s26
    %v31 = vmul.f32 %v25, %v30
    %v32 = vstv %s27
    %v33 = vadd.f32 %v31, %v32
    %v34 = vlaneseq
    %v35 = vshrl.u32 %v34, 7
    %v36 = vsub.s32 7, %v35
    %v37 = vrot.slane %v33, %v36
    %v38 = vmul.f32 %v37, %v25
    %vm39 = vcmask 15360
    %v40 = vsel %vm39, %v38, -inf
    %v41 = vrot.slane %v40, 4
    %v42 = vmax.f32 %v40, %v41
    %v43 = vrot.slane %v42, 2
    %v44 = vmax.f32 %v42, %v43
    %v45 = vrot.slane %v44, 1
    %v46 = vmax.f32 %v44, %v45
    %v47 = vsub.f32 %v38, %v46
    %v48 = vmul.f32 %v47, 1.442695
    %v49 = vpow.pop %v48
    %v50 = vsel %vm39, %v49, 0.0
    %v51 = vrot.slane %v50, 4
    %v52 = vadd.f32 %v50, %v51
    %v53 = vrot.slane %v52, 2
    %v54 = vadd.f32 %v52, %v53
    %v55 = vrot.slane %v54, 1
    %v56 = vadd.f32 %v54, %v55
    %v57 = vmul.f32 %v49, %v25
    %v58 = vsel %vm39, %v57, 0.0
    %v59 = vrot.slane %v58, 4
    %v60 = vadd.f32 %v58, %v59
    %v61 = vrot.slane %v60, 2
    %v62 = vadd.f32 %v60, %v61
    %v63 = vrot.slane %v62, 1
    %v64 = vadd.f32 %v62, %v63
    %v65 = vrcp.pop %v56
    %v66 = vmul.f32 %v64, %v65
    %v67 = vstv %s28
    %v68 = vmul.f32 %v66, %v67
    %v69 = vstv %s29
    %v70 = vadd.f32 %v68, %v69
    %vm71 = vcmask 8192
    %72 = vst.msk [vmem:[#allocation5] sm:$0x1] %vm71, %v70
    // Predicated region
    $region14: #{tpu_custom_call.1} parent=1 // pred_check
      _
    $region15: #{tpu_custom_call.1} parent=1 // pred_check_branch
      %74 = sbr.rel (0) target = $region17
    $region16: #{tpu_custom_call.1} parent=1 // pred_region
      %s76 = ssub.s32 16, 16
      %77 = vsyncadd [#allocation3], %s76
      %s79 = sshll.u32 [#allocation5], 4
      %s80 = int_to_ptr.vmem [resolvable:$true] %s79
      %82 = dma.vmem_to_hbm [thread:$0]  %s80, 16, %s2, [#allocation3]
    $region17: #{tpu_custom_call.1} parent=1 // pred_fallthru
      _
    // Predicated region
    $region18: #{tpu_custom_call.1} parent=1 // pred_check
      _
    $region19: #{tpu_custom_call.1} parent=1 // pred_check_branch
      %84 = sbr.rel (0) target = $region21
    $region20: #{tpu_custom_call.1} parent=1 // pred_region
      %85 = dma.done [#allocation3], 16
    $region21: #{tpu_custom_call.1} parent=1 // pred_fallthru
      _
    %86 = vsyncpa [#allocation3], 1
    %87 = vsyncpa [#allocation4], 1

</llo_original>
